<compile_context>
chip_gen: v7x
topology: tpu7x:2x2x1
jax: 0.10.0
libtpu: 0.0.40
codegen_flags: <defaults>
</compile_context>

<pallas_src>
import functools

import jax
import jax.numpy as jnp
from jax.experimental import pallas as pl
from jax.experimental.pallas import tpu as pltpu


def _attention_kernel(x_ref, wqkv_ref, wp_ref, bp_ref, o_ref, *, num_heads):
    """Fused multi-head self-attention for one batch element.

    x_ref    : (1, N, C)        VMEM, f32 (cast to operand dtype in-kernel)
    wqkv_ref : (C, 3*H*hd)      VMEM, operand dtype (scale folded into Q cols)
    wp_ref   : (H*hd, C)        VMEM, operand dtype (un-split proj weight^T)
    bp_ref   : (1, C)           VMEM, f32
    o_ref    : (1, N, C)        VMEM, f32
    """
    _, N, C = x_ref.shape
    ahd = wp_ref.shape[0]
    H = num_heads
    hd = ahd // H
    cd = wqkv_ref.dtype                                  # MXU operand dtype

    # ---- fused QKV projection: one (N, C) @ (C, 3*ahd) MXU pass ------------
    x = x_ref[0].astype(cd)                              # in-kernel cast (VPU)
    qkv = jnp.dot(x, wqkv_ref[...],
                  preferred_element_type=jnp.float32)    # (N, 3*ahd) f32

    # ---- per-head views: lane slices -> new leading head axis --------------
    def split_heads(base):
        return jnp.stack(
            [qkv[:, base + h * hd: base + (h + 1) * hd] for h in range(H)],
            axis=0)                                      # (H, N, hd) f32

    q = split_heads(0)            # scale already folded into the Q weights
    k = split_heads(ahd)
    v = split_heads(2 * ahd)

    # ---- attention core (K transpose absorbed by the contraction) ----------
    s = jnp.einsum('hnd,hmd->hnm', q.astype(cd), k.astype(cd),
                   preferred_element_type=jnp.float32)   # (H, N, N) f32

    # Numerically stable softmax in f32; exact reciprocal (EUP/VPU has slack).
    s = s - jnp.max(s, axis=-1, keepdims=True)
    p = jnp.exp(s)
    p = p * pl.reciprocal(jnp.sum(p, axis=-1, keepdims=True), approx=False)

    o = jnp.einsum('hnm,hmd->hnd', p.astype(cd), v.astype(cd),
                   preferred_element_type=jnp.float32)   # (H, N, hd) f32

    # ---- heads back onto the lane axis, fused output projection ------------
    o_cat = jnp.concatenate([o[h] for h in range(H)], axis=-1)      # (N, ahd)
    out = jnp.dot(o_cat.astype(cd), wp_ref[...],
                  preferred_element_type=jnp.float32) + bp_ref[...]  # (N, C)
    o_ref[...] = out[None].astype(o_ref.dtype)


def prepare_attention_params(w_qkv, w_proj, b_proj, *, num_heads, head_dim,
                             scale, operand_dtype=jnp.bfloat16):
    """One-time weight prep (outside the kernel / call path).

    w_qkv  : (C, 3*H*hd)  -- transposed PyTorch qkv.weight (kept fused)
    w_proj : (H*hd, C)    -- transposed PyTorch proj.weight (kept fused)
    b_proj : (1, C)

    Folds `scale` into the Q columns of the fused qkv weight and casts the
    MXU operands to `operand_dtype`.  bf16 is the default for ALL generations
    (the v5e MXU accepts bf16 too); softmax + accumulation stay f32 in-kernel.
    """
    ahd = num_heads * head_dim
    col_scale = jnp.concatenate([
        jnp.full((ahd,), scale, dtype=w_qkv.dtype),      # Q columns
        jnp.ones((2 * ahd,), dtype=w_qkv.dtype),         # K, V columns
    ])
    w_qkv_scaled = w_qkv * col_scale[None, :]
    return (w_qkv_scaled.astype(operand_dtype),
            w_proj.astype(operand_dtype),
            b_proj.astype(jnp.float32))


def attention_pallas(x, w_qkv, w_proj, b_proj, *, num_heads):
    """x: (B, N, C) float32.  Weights from `prepare_attention_params`."""
    B, N, C = x.shape
    ahd3 = w_qkv.shape[1]
    ahd = w_proj.shape[0]

    kernel = functools.partial(_attention_kernel, num_heads=num_heads)

    return pl.pallas_call(
        kernel,
        out_shape=jax.ShapeDtypeStruct((B, N, C), x.dtype),
        grid_spec=pltpu.PrefetchScalarGridSpec(
            num_scalar_prefetch=0,
            grid=(B,),                                   # batch axis -> both v7x TCs
            in_specs=[
                pl.BlockSpec((1, N, C), lambda b: (b, 0, 0)),
                pl.BlockSpec((C, ahd3), lambda b: (0, 0)),   # resident weights
                pl.BlockSpec((ahd, C), lambda b: (0, 0)),
                pl.BlockSpec((1, C), lambda b: (0, 0)),
            ],
            out_specs=pl.BlockSpec((1, N, C), lambda b: (b, 0, 0)),
        ),
        compiler_params=pltpu.CompilerParams(
            dimension_semantics=("parallel",)),
    )(x, w_qkv, w_proj, b_proj)


def attention_ref(x, w_qkv, w_proj, b_proj, *, num_heads, head_dim, scale):
    """Pure-JAX reference replicating the PyTorch forward (f32)."""
    B, N, C = x.shape
    qkv = x @ w_qkv                                            # (B, N, 3*H*hd)
    qkv = qkv.reshape(B, N, 3, num_heads, head_dim)
    qkv = jnp.transpose(qkv, (2, 0, 3, 1, 4))                  # (3, B, H, N, hd)
    q, k, v = qkv[0], qkv[1], qkv[2]
    q = q * scale
    attn = q @ jnp.swapaxes(k, -2, -1)                         # (B, H, N, N)
    attn = jax.nn.softmax(attn, axis=-1)
    out = attn @ v                                             # (B, H, N, hd)
    out = jnp.transpose(out, (0, 2, 1, 3)).reshape(B, N, -1)   # (B, N, H*hd)
    return out @ w_proj + b_proj[0]


if __name__ == "__main__":
    # Small shapes consistent with the module: dim=32, num_heads=4 -> head_dim=8
    B, N, C = 2, 8, 32
    num_heads = 4
    head_dim = C // num_heads
    all_head_dim = num_heads * head_dim
    scale = head_dim ** (-0.5)

    key = jax.random.PRNGKey(0)
    kx, kqkv, kproj, kb = jax.random.split(key, 4)

    x = jax.random.normal(kx, (B, N, C), dtype=jnp.float32)
    # Deterministic synthetic parameters (~nn.Linear scale), pre-transposed.
    w_qkv = jax.random.normal(kqkv, (C, 3 * all_head_dim), jnp.float32) * (C ** -0.5)
    w_proj = jax.random.normal(kproj, (all_head_dim, C), jnp.float32) * (all_head_dim ** -0.5)
    b_proj = jax.random.normal(kb, (1, C), jnp.float32) * 0.02

    # High-precision reference so tolerances reflect kernel error only.
    with jax.default_matmul_precision("highest"):
        ref = attention_ref(x, w_qkv, w_proj, b_proj,
                            num_heads=num_heads, head_dim=head_dim, scale=scale)

    # --- f32 operand path (exact softmax reciprocal -> tightened tolerance).
    p32 = prepare_attention_params(w_qkv, w_proj, b_proj,
                                   num_heads=num_heads, head_dim=head_dim,
                                   scale=scale, operand_dtype=jnp.float32)
    out32 = jax.block_until_ready(attention_pallas(x, *p32, num_heads=num_heads))
    assert out32.shape == (B, N, C)
    assert jnp.allclose(out32, ref, atol=5e-3, rtol=5e-3), "f32 mismatch vs reference"

    # --- bf16 MXU-operand path (default; valid on v5e/v6e/v7x). Softmax and
    #     all accumulation stay f32 in-kernel; looser tolerance for bf16 operands.
    p16 = prepare_attention_params(w_qkv, w_proj, b_proj,
                                   num_heads=num_heads, head_dim=head_dim,
                                   scale=scale, operand_dtype=jnp.bfloat16)
    out16 = jax.block_until_ready(attention_pallas(x, *p16, num_heads=num_heads))
    assert out16.shape == (B, N, C) and out16.dtype == x.dtype
    assert jnp.allclose(out16, ref, atol=1e-1, rtol=1e-1), "bf16 mismatch vs reference"

    print("KERNEL_OK")
</pallas_src>

<mosaic_0001>
module attributes {stable_mosaic.version = 11 : i64} {
  func.func @_attention_kernel(%arg0: i32, %arg1: memref<1x8x32xf32, #tpu.memory_space<vmem>>, %arg2: memref<32x96xf32, #tpu.memory_space<vmem>>, %arg3: memref<32x32xf32, #tpu.memory_space<vmem>>, %arg4: memref<1x32xf32, #tpu.memory_space<vmem>>, %arg5: memref<1x8x32xf32, #tpu.memory_space<vmem>>) attributes {dimension_semantics = [#tpu.dimension_semantics<parallel>], iteration_bounds = array<i64: 2>, scalar_prefetch = 0 : i64, scratch_operands = 0 : i64, tpu.core_type = #tpu.core_type<tc>, window_params = [{transform_indices = @transform_0, window_bounds = array<i64: 1, 8, 32>}, {pipeline_mode = #tpu.pipeline_mode<synchronous>, transform_indices = @transform_1, window_bounds = array<i64: 32, 96>}, {pipeline_mode = #tpu.pipeline_mode<synchronous>, transform_indices = @transform_2, window_bounds = array<i64: 32, 32>}, {pipeline_mode = #tpu.pipeline_mode<synchronous>, transform_indices = @transform_3, window_bounds = array<i64: 1, 32>}, {transform_indices = @transform_4, window_bounds = array<i64: 1, 8, 32>}]} {
    %c0 = arith.constant 0 : index
    %c0_0 = arith.constant 0 : index
    %c0_1 = arith.constant 0 : index
    %0 = vector.load %arg1[%c0, %c0_0, %c0_1] : memref<1x8x32xf32, #tpu.memory_space<vmem>>, vector<1x8x32xf32>
    %1 = vector.shape_cast %0 : vector<1x8x32xf32> to vector<8x32xf32>
    %c0_2 = arith.constant 0 : index
    %c0_3 = arith.constant 0 : index
    %2 = vector.load %arg2[%c0_2, %c0_3] : memref<32x96xf32, #tpu.memory_space<vmem>>, vector<32x96xf32>
    %cst = arith.constant dense<0.000000e+00> : vector<8x96xf32>
    %3 = tpu.matmul %1, %2, %cst {dimension_numbers = #tpu.dot_dimension_numbers<[1], [0], [0], [1], [0, 0, 1, 1], [], []>} : vector<8x32xf32>, vector<32x96xf32>, vector<8x96xf32> -> vector<8x96xf32>
    %4 = vector.extract_strided_slice %3 {offsets = [0, 0], sizes = [8, 8], strides = [1, 1]} : vector<8x96xf32> to vector<8x8xf32>
    %5 = vector.extract_strided_slice %3 {offsets = [0, 8], sizes = [8, 8], strides = [1, 1]} : vector<8x96xf32> to vector<8x8xf32>
    %6 = vector.extract_strided_slice %3 {offsets = [0, 16], sizes = [8, 8], strides = [1, 1]} : vector<8x96xf32> to vector<8x8xf32>
    %7 = vector.extract_strided_slice %3 {offsets = [0, 24], sizes = [8, 8], strides = [1, 1]} : vector<8x96xf32> to vector<8x8xf32>
    %8 = vector.shape_cast %4 : vector<8x8xf32> to vector<1x8x8xf32>
    %9 = vector.shape_cast %5 : vector<8x8xf32> to vector<1x8x8xf32>
    %10 = vector.shape_cast %6 : vector<8x8xf32> to vector<1x8x8xf32>
    %11 = vector.shape_cast %7 : vector<8x8xf32> to vector<1x8x8xf32>
    %12 = tpu.concatenate %8, %9, %10, %11 in 0 : vector<1x8x8xf32>, vector<1x8x8xf32>, vector<1x8x8xf32>, vector<1x8x8xf32> -> vector<4x8x8xf32>
    %13 = vector.extract_strided_slice %3 {offsets = [0, 32], sizes = [8, 8], strides = [1, 1]} : vector<8x96xf32> to vector<8x8xf32>
    %14 = vector.extract_strided_slice %3 {offsets = [0, 40], sizes = [8, 8], strides = [1, 1]} : vector<8x96xf32> to vector<8x8xf32>
    %15 = vector.extract_strided_slice %3 {offsets = [0, 48], sizes = [8, 8], strides = [1, 1]} : vector<8x96xf32> to vector<8x8xf32>
    %16 = vector.extract_strided_slice %3 {offsets = [0, 56], sizes = [8, 8], strides = [1, 1]} : vector<8x96xf32> to vector<8x8xf32>
    %17 = vector.shape_cast %13 : vector<8x8xf32> to vector<1x8x8xf32>
    %18 = vector.shape_cast %14 : vector<8x8xf32> to vector<1x8x8xf32>
    %19 = vector.shape_cast %15 : vector<8x8xf32> to vector<1x8x8xf32>
    %20 = vector.shape_cast %16 : vector<8x8xf32> to vector<1x8x8xf32>
    %21 = tpu.concatenate %17, %18, %19, %20 in 0 : vector<1x8x8xf32>, vector<1x8x8xf32>, vector<1x8x8xf32>, vector<1x8x8xf32> -> vector<4x8x8xf32>
    %22 = vector.extract_strided_slice %3 {offsets = [0, 64], sizes = [8, 8], strides = [1, 1]} : vector<8x96xf32> to vector<8x8xf32>
    %23 = vector.extract_strided_slice %3 {offsets = [0, 72], sizes = [8, 8], strides = [1, 1]} : vector<8x96xf32> to vector<8x8xf32>
    %24 = vector.extract_strided_slice %3 {offsets = [0, 80], sizes = [8, 8], strides = [1, 1]} : vector<8x96xf32> to vector<8x8xf32>
    %25 = vector.extract_strided_slice %3 {offsets = [0, 88], sizes = [8, 8], strides = [1, 1]} : vector<8x96xf32> to vector<8x8xf32>
    %26 = vector.shape_cast %22 : vector<8x8xf32> to vector<1x8x8xf32>
    %27 = vector.shape_cast %23 : vector<8x8xf32> to vector<1x8x8xf32>
    %28 = vector.shape_cast %24 : vector<8x8xf32> to vector<1x8x8xf32>
    %29 = vector.shape_cast %25 : vector<8x8xf32> to vector<1x8x8xf32>
    %30 = tpu.concatenate %26, %27, %28, %29 in 0 : vector<1x8x8xf32>, vector<1x8x8xf32>, vector<1x8x8xf32>, vector<1x8x8xf32> -> vector<4x8x8xf32>
    "tpu.trace_start"() <{level = 10 : i32, message = "hnd,hmd->hnm"}> : () -> ()
    %cst_4 = arith.constant dense<0.000000e+00> : vector<4x8x8xf32>
    %31 = tpu.matmul %12, %21, %cst_4 {dimension_numbers = #tpu.dot_dimension_numbers<[2], [2], [1], [1], [0, 0, 0, 1, 1, 1], [0], [0]>} : vector<4x8x8xf32>, vector<4x8x8xf32>, vector<4x8x8xf32> -> vector<4x8x8xf32>
    "tpu.trace_stop"() : () -> ()
    %cst_5 = arith.constant dense<0xFF800000> : vector<4x8xf32>
    %32 = vector.multi_reduction <maximumf>, %31, %cst_5 [2] : vector<4x8x8xf32> to vector<4x8xf32>
    %33 = vector.shape_cast %32 : vector<4x8xf32> to vector<4x8x1xf32>
    %34 = vector.broadcast %33 : vector<4x8x1xf32> to vector<4x8x8xf32>
    %35 = arith.subf %31, %34 : vector<4x8x8xf32>
    %36 = math.exp %35 : vector<4x8x8xf32>
    %cst_6 = arith.constant dense<0.000000e+00> : vector<4x8xf32>
    %37 = vector.multi_reduction <add>, %36, %cst_6 [2] : vector<4x8x8xf32> to vector<4x8xf32>
    %38 = vector.shape_cast %37 : vector<4x8xf32> to vector<4x8x1xf32>
    %39 = tpu.reciprocal %38 : vector<4x8x1xf32> -> vector<4x8x1xf32>
    %40 = vector.broadcast %39 : vector<4x8x1xf32> to vector<4x8x8xf32>
    %41 = arith.mulf %36, %40 : vector<4x8x8xf32>
    "tpu.trace_start"() <{level = 10 : i32, message = "hnm,hmd->hnd"}> : () -> ()
    %cst_7 = arith.constant dense<0.000000e+00> : vector<4x8x8xf32>
    %42 = tpu.matmul %41, %30, %cst_7 {dimension_numbers = #tpu.dot_dimension_numbers<[2], [1], [1], [2], [0, 0, 0, 1, 1, 2], [0], [0]>} : vector<4x8x8xf32>, vector<4x8x8xf32>, vector<4x8x8xf32> -> vector<4x8x8xf32>
    "tpu.trace_stop"() : () -> ()
    %43 = vector.extract_strided_slice %42 {offsets = [0, 0, 0], sizes = [1, 8, 8], strides = [1, 1, 1]} : vector<4x8x8xf32> to vector<1x8x8xf32>
    %44 = vector.shape_cast %43 : vector<1x8x8xf32> to vector<8x8xf32>
    %45 = vector.extract_strided_slice %42 {offsets = [1, 0, 0], sizes = [1, 8, 8], strides = [1, 1, 1]} : vector<4x8x8xf32> to vector<1x8x8xf32>
    %46 = vector.shape_cast %45 : vector<1x8x8xf32> to vector<8x8xf32>
    %47 = vector.extract_strided_slice %42 {offsets = [2, 0, 0], sizes = [1, 8, 8], strides = [1, 1, 1]} : vector<4x8x8xf32> to vector<1x8x8xf32>
    %48 = vector.shape_cast %47 : vector<1x8x8xf32> to vector<8x8xf32>
    %49 = vector.extract_strided_slice %42 {offsets = [3, 0, 0], sizes = [1, 8, 8], strides = [1, 1, 1]} : vector<4x8x8xf32> to vector<1x8x8xf32>
    %50 = vector.shape_cast %49 : vector<1x8x8xf32> to vector<8x8xf32>
    %51 = tpu.concatenate %44, %46, %48, %50 in 1 : vector<8x8xf32>, vector<8x8xf32>, vector<8x8xf32>, vector<8x8xf32> -> vector<8x32xf32>
    %c0_8 = arith.constant 0 : index
    %c0_9 = arith.constant 0 : index
    %52 = vector.load %arg3[%c0_8, %c0_9] : memref<32x32xf32, #tpu.memory_space<vmem>>, vector<32x32xf32>
    %cst_10 = arith.constant dense<0.000000e+00> : vector<8x32xf32>
    %53 = tpu.matmul %51, %52, %cst_10 {dimension_numbers = #tpu.dot_dimension_numbers<[1], [0], [0], [1], [0, 0, 1, 1], [], []>} : vector<8x32xf32>, vector<32x32xf32>, vector<8x32xf32> -> vector<8x32xf32>
    %c0_11 = arith.constant 0 : index
    %c0_12 = arith.constant 0 : index
    %54 = vector.load %arg4[%c0_11, %c0_12] : memref<1x32xf32, #tpu.memory_space<vmem>>, vector<1x32xf32>
    %55 = vector.broadcast %54 : vector<1x32xf32> to vector<8x32xf32>
    %56 = arith.addf %53, %55 : vector<8x32xf32>
    %57 = vector.shape_cast %56 : vector<8x32xf32> to vector<1x8x32xf32>
    %c0_13 = arith.constant 0 : index
    %c0_14 = arith.constant 0 : index
    %c0_15 = arith.constant 0 : index
    %58 = vector.load %arg5[%c0_13, %c0_14, %c0_15] : memref<1x8x32xf32, #tpu.memory_space<vmem>>, vector<1x8x32xf32>
    tpu.vector_store %arg5[%c0_13, %c0_14, %c0_15], %57 {strides = array<i32>} : memref<1x8x32xf32, #tpu.memory_space<vmem>>, vector<1x8x32xf32>,
    return
  }
  func.func @transform_0(%arg0: i32) -> (i32, i32, i32) {
    %c0_i32 = arith.constant 0 : i32
    %c0_i32_0 = arith.constant 0 : i32
    %c0_i32_1 = arith.constant 0 : i32
    return %arg0, %c0_i32, %c0_i32_0 : i32, i32, i32
  }
  func.func @transform_1(%arg0: i32) -> (i32, i32) {
    %c0_i32 = arith.constant 0 : i32
    %c0_i32_0 = arith.constant 0 : i32
    %c0_i32_1 = arith.constant 0 : i32
    return %c0_i32, %c0_i32_0 : i32, i32
  }
  func.func @transform_2(%arg0: i32) -> (i32, i32) {
    %c0_i32 = arith.constant 0 : i32
    %c0_i32_0 = arith.constant 0 : i32
    %c0_i32_1 = arith.constant 0 : i32
    return %c0_i32, %c0_i32_0 : i32, i32
  }
  func.func @transform_3(%arg0: i32) -> (i32, i32) {
    %c0_i32 = arith.constant 0 : i32
    %c0_i32_0 = arith.constant 0 : i32
    %c0_i32_1 = arith.constant 0 : i32
    return %c0_i32, %c0_i32_0 : i32, i32
  }
  func.func @transform_4(%arg0: i32) -> (i32, i32, i32) {
    %c0_i32 = arith.constant 0 : i32
    %c0_i32_0 = arith.constant 0 : i32
    %c0_i32_1 = arith.constant 0 : i32
    return %arg0, %c0_i32, %c0_i32_0 : i32, i32, i32
  }
}

</mosaic_0001>

<llo_original>
// kernel: tpu_custom_call.1
$region0: #{tpu_custom_call.1}
  #allocation0 [shape = 'u32[]', space=smem, size = 0x4, offset = 0x4, fixed_abs, tag = 'smem constant byte address 0x4 - core index']
  #allocation1 [shape = 'u32[144,128]{1,0:T(1,128)}', space=vmem, size = 0x12000, scoped, tag = 'internal scratch']
  %s0 = inlined_call_operand.hbm [shape: f32[2,8,32], index: 0, kind: input, shape index: {}]
  %s1 = inlined_call_operand.hbm [shape: f32[32,96], index: 1, kind: input, shape index: {}]
  %s2 = inlined_call_operand.hbm [shape: f32[32,32], index: 2, kind: input, shape index: {}]
  %s3 = inlined_call_operand.vmem [shape: f32[1,32], index: 3, kind: input, shape index: {}]
  %s4 = inlined_call_operand.hbm [shape: f32[2,8,32], index: 4, kind: output, shape index: {}]
  %s5 = sld [smem:[#allocation0]]
  $region61: #{tpu_custom_call.1} parent=0
    _
  %s7 = ssub.s32 1, %s5
  %s8 = scalar_select 0, %s7, %s5
  $region1: #{tpu_custom_call.1} parent=0
    #allocation2 [shape = 'u8[8192]{0}', space=vmem, size = 0x2000, scoped, tag = 'input window, operand 0']
    #allocation3 [shape = 's32[2]{0}', space=sflag, size = 0x8, scoped, tag = 'scoped memory for tpu_custom_call.1']
    #allocation4 [shape = 's32[2]{0}', space=sflag, size = 0x8, scoped, tag = 'scoped memory for tpu_custom_call.1']
    #allocation5 [shape = 'u8[16384]{0}', space=vmem, size = 0x4000, scoped, tag = 'input window, operand 1, single buffered']
    #allocation6 [shape = 's32[1]{0}', space=sflag, size = 0x4, scoped, tag = 'scoped memory for tpu_custom_call.1']
    #allocation7 [shape = 'u8[16384]{0}', space=vmem, size = 0x4000, scoped, tag = 'input window, operand 2, single buffered']
    #allocation8 [shape = 'u8[8192]{0}', space=vmem, size = 0x2000, scoped, tag = 'output window, operand 0']
    %9 = vsyncpa [#allocation3], 0
    %s10 = scalar_lea.sflag [#allocation3], 1
    %11 = vsyncpa %s10, 0
    %12 = vsyncpa [#allocation6], 0
    %13 = vsyncpa [#allocation4], 0
    %s14 = scalar_lea.sflag [#allocation4], 1
    %15 = vsyncpa %s14, 0
    loop: start=0, step=1, limit=4
    $region2: #{tpu_custom_call.1} parent=1 // loop_pre_header
      _
    $region3: #{tpu_custom_call.1} parent=1 // loop_header
      %s17 = sphi 0, %s21
      %p18 = scmp.ge.s32.totalorder %s17, 4
      %s27 = sphi 0, %s29
      %s30 = sphi 0, %s27
      %s31 = sphi 0, %s30
      %s47 = sphi 0, %s31
      %s51 = sphi 0, %s51
      %s53 = sphi 0, %s51
      %s54 = sphi 0, %s53
      %s68 = sphi 0, %s54
      %s72 = sphi 0, %s72
      %s74 = sphi 0, %s72
      %s75 = sphi 0, %s74
      %s89 = sphi 0, %s75
      %s93 = sphi 0, %s93
      %s95 = sphi 0, %s93
      %s96 = sphi 0, %s95
      %s110 = sphi 0, %s96
      %s116 = sphi 0, %s118
      %s119 = sphi 0, %s116
      %s120 = sphi 0, %s119
      %s136 = sphi 0, %s120
    $region4: #{tpu_custom_call.1} parent=1 // loop_header_branch
      %20 = sbr.rel (%p18) target = $region8
    $region5: #{tpu_custom_call.1} parent=1 // loop_body
      %s22 = ssub.s32 %s17, 1
      %s23 = ssub.s32 %s17, 2
      %s24 = sadd.s32 %s17, 1
      %s25 = ssub.s32 %s17, %s24
      %p26 = scmp.eq.s32.totalorder %s25, 0
      %s28 = sadd.s32 %s27, 1
      %s29 = scalar_select %p26, %s27, %s28
      %p32 = pneg %p26
      %p33 = scmp.eq.s32.totalorder %s17, 1
      %p34 = por %p32, %p33
      %p35 = scmp.ne.s32.totalorder %s27, %s30
      %p36 = scmp.eq.s32.totalorder %s17, 0
      %p37 = por %p35, %p36
      %p38 = scmp.ne.s32.totalorder %s27, %s30
      %p39 = scmp.eq.s32.totalorder %s22, 1
      %p40 = por %p38, %p39
      %p41 = scmp.ne.s32.totalorder %s30, %s31
      %p42 = scmp.eq.s32.totalorder %s22, 0
      %p43 = por %p41, %p42
      %p44 = scmp.ne.s32.totalorder %s30, %s31
      %p45 = scmp.eq.s32.totalorder %s23, 1
      %p46 = por %p44, %p45
      %p48 = scmp.ne.s32.totalorder %s31, %s47
      %p49 = scmp.eq.s32.totalorder %s23, 0
      %p50 = por %p48, %p49
      %s52 = sadd.s32 %s51, 1
      %p55 = scmp.eq.s32.totalorder %s17, 1
      %p56 = scmp.ne.s32.totalorder %s51, %s53
      %p57 = scmp.eq.s32.totalorder %s17, 0
      %p58 = por %p56, %p57
      %p59 = scmp.ne.s32.totalorder %s51, %s53
      %p60 = scmp.eq.s32.totalorder %s22, 1
      %p61 = por %p59, %p60
      %p62 = scmp.ne.s32.totalorder %s53, %s54
      %p63 = scmp.eq.s32.totalorder %s22, 0
      %p64 = por %p62, %p63
      %p65 = scmp.ne.s32.totalorder %s53, %s54
      %p66 = scmp.eq.s32.totalorder %s23, 1
      %p67 = por %p65, %p66
      %p69 = scmp.ne.s32.totalorder %s54, %s68
      %p70 = scmp.eq.s32.totalorder %s23, 0
      %p71 = por %p69, %p70
      %s73 = sadd.s32 %s72, 1
      %p76 = scmp.eq.s32.totalorder %s17, 1
      %p77 = scmp.ne.s32.totalorder %s72, %s74
      %p78 = scmp.eq.s32.totalorder %s17, 0
      %p79 = por %p77, %p78
      %p80 = scmp.ne.s32.totalorder %s72, %s74
      %p81 = scmp.eq.s32.totalorder %s22, 1
      %p82 = por %p80, %p81
      %p83 = scmp.ne.s32.totalorder %s74, %s75
      %p84 = scmp.eq.s32.totalorder %s22, 0
      %p85 = por %p83, %p84
      %p86 = scmp.ne.s32.totalorder %s74, %s75
      %p87 = scmp.eq.s32.totalorder %s23, 1
      %p88 = por %p86, %p87
      %p90 = scmp.ne.s32.totalorder %s75, %s89
      %p91 = scmp.eq.s32.totalorder %s23, 0
      %p92 = por %p90, %p91
      %s94 = sadd.s32 %s93, 1
      %p97 = scmp.eq.s32.totalorder %s17, 1
      %p98 = scmp.ne.s32.totalorder %s93, %s95
      %p99 = scmp.eq.s32.totalorder %s17, 0
      %p100 = por %p98, %p99
      %p101 = scmp.ne.s32.totalorder %s93, %s95
      %p102 = scmp.eq.s32.totalorder %s22, 1
      %p103 = por %p101, %p102
      %p104 = scmp.ne.s32.totalorder %s95, %s96
      %p105 = scmp.eq.s32.totalorder %s22, 0
      %p106 = por %p104, %p105
      %p107 = scmp.ne.s32.totalorder %s95, %s96
      %p108 = scmp.eq.s32.totalorder %s23, 1
      %p109 = por %p107, %p108
      %p111 = scmp.ne.s32.totalorder %s96, %s110
      %p112 = scmp.eq.s32.totalorder %s23, 0
      %p113 = por %p111, %p112
      %s114 = ssub.s32 %s17, %s24
      %p115 = scmp.eq.s32.totalorder %s114, 0
      %s117 = sadd.s32 %s116, 1
      %s118 = scalar_select %p115, %s116, %s117
      %p121 = pneg %p115
      %p122 = scmp.eq.s32.totalorder %s17, 1
      %p123 = por %p121, %p122
      %p124 = scmp.ne.s32.totalorder %s116, %s119
      %p125 = scmp.eq.s32.totalorder %s17, 0
      %p126 = por %p124, %p125
      %p127 = scmp.ne.s32.totalorder %s116, %s119
      %p128 = scmp.eq.s32.totalorder %s22, 1
      %p129 = por %p127, %p128
      %p130 = scmp.ne.s32.totalorder %s119, %s120
      %p131 = scmp.eq.s32.totalorder %s22, 0
      %p132 = por %p130, %p131
      %p133 = scmp.ne.s32.totalorder %s119, %s120
      %p134 = scmp.eq.s32.totalorder %s23, 1
      %p135 = por %p133, %p134
      %p137 = scmp.ne.s32.totalorder %s120, %s136
      %p138 = scmp.eq.s32.totalorder %s23, 0
      %p139 = por %p137, %p138
      %p140 = scmp.le.s32.totalorder 1, %s17
      %p141 = scmp.lt.s32.totalorder %s17, 3
      %p142 = pnand %p140, %p141
      %p143 = pneg %p142
      // Predicated region
      $region9: #{tpu_custom_call.1} parent=5 // pred_check
        _
      $region10: #{tpu_custom_call.1} parent=5 // pred_check_branch
        %145 = sbr.rel (%p142) target = $region12
      $region11: #{tpu_custom_call.1} parent=5 // pred_region
        %s146 = ssub.s32 %s17, 1
        // Predicated region
        $region13: #{tpu_custom_call.1} parent=11 // pred_check
          %p147 = pneg %p64
        $region14: #{tpu_custom_call.1} parent=11 // pred_check_branch
          %149 = sbr.rel (%p147) target = $region16
        $region15: #{tpu_custom_call.1} parent=11 // pred_region
          %s151 = ssub.s32 512, 512
          %152 = vsyncadd [#allocation6], %s151
          %s153 = sshll.u32 [#allocation5], 4
          %s154 = int_to_ptr.vmem [resolvable:$true] %s153
          %159 = dma.hbm_to_vmem [thread:$0]  %s1, 512, %s154, [#allocation6], 128, 128, 8
        $region16: #{tpu_custom_call.1} parent=11 // pred_fallthru
          _
        // Predicated region
        $region17: #{tpu_custom_call.1} parent=11 // pred_check
          %p160 = pneg %p85
        $region18: #{tpu_custom_call.1} parent=11 // pred_check_branch
          %162 = sbr.rel (%p160) target = $region20
        $region19: #{tpu_custom_call.1} parent=11 // pred_region
          %s164 = ssub.s32 512, 512
          %165 = vsyncadd [#allocation6], %s164
          %s166 = sshll.u32 [#allocation7], 4
          %s167 = int_to_ptr.vmem [resolvable:$true] %s166
          %172 = dma.hbm_to_vmem [thread:$0]  %s2, 512, %s167, [#allocation6], 128, 128, 8
        $region20: #{tpu_custom_call.1} parent=11 // pred_fallthru
          _
        // Predicated region
        $region21: #{tpu_custom_call.1} parent=11 // pred_check
          %p173 = pneg %p106
        $region22: #{tpu_custom_call.1} parent=11 // pred_check_branch
          %175 = sbr.rel (%p173) target = $region24
        $region23: #{tpu_custom_call.1} parent=11 // pred_region
          _
        $region24: #{tpu_custom_call.1} parent=11 // pred_fallthru
          _
      $region12: #{tpu_custom_call.1} parent=5 // pred_fallthru
        _
      %p176 = scmp.lt.s32.totalorder %s17, 2
      // Predicated region
      $region25: #{tpu_custom_call.1} parent=5 // pred_check
        %p177 = pneg %p176
      $region26: #{tpu_custom_call.1} parent=5 // pred_check_branch
        %179 = sbr.rel (%p177) target = $region28
      $region27: #{tpu_custom_call.1} parent=5 // pred_region
        // Predicated region
        $region29: #{tpu_custom_call.1} parent=27 // pred_check
          %p180 = pneg %p37
        $region30: #{tpu_custom_call.1} parent=27 // pred_check_branch
          %182 = sbr.rel (%p180) target = $region32
        $region31: #{tpu_custom_call.1} parent=27 // pred_region
          %s183 = sand.u32 %s27, 1
          %s184 = scalar_lea.sflag [#allocation3], %s183
          %s185 = sand.u32 %s27, 1
          %s186 = smul.addr %s185, 8
          %s187 = scalar_lea.vmem [#allocation2], %s186
          %s189 = ssub.s32 128, 128
          %190 = vsyncadd %s184, %s189
          %s191 = smul.addr %s17, 128
          %s192 = scalar_lea.hbm %s0, %s191
          %s194 = sshll.u32 %s187, 4
          %s195 = int_to_ptr.vmem [resolvable:$true] %s194
          %197 = dma.hbm_to_vmem [thread:$0]  %s192, 128, %s195, %s184
        $region32: #{tpu_custom_call.1} parent=27 // pred_fallthru
          _
      $region28: #{tpu_custom_call.1} parent=5 // pred_fallthru
        _
      %p198 = scmp.le.s32.totalorder 1, %s17
      %p199 = scmp.lt.s32.totalorder %s17, 3
      %p200 = pnand %p198, %p199
      %p201 = pneg %p200
      // Predicated region
      $region33: #{tpu_custom_call.1} parent=5 // pred_check
        _
      $region34: #{tpu_custom_call.1} parent=5 // pred_check_branch
        %203 = sbr.rel (%p200) target = $region36
      $region35: #{tpu_custom_call.1} parent=5 // pred_region
        %s204 = ssub.s32 %s17, 1
        %s205 = sand.u32 %s30, 1
        %s206 = scalar_lea.sflag [#allocation3], %s205
        %s207 = sand.u32 %s30, 1
        %s208 = smul.addr %s207, 8
        %s209 = scalar_lea.vmem [#allocation2], %s208
        // Predicated region
        $region37: #{tpu_custom_call.1} parent=35 // pred_check
          %p210 = pneg %p43
        $region38: #{tpu_custom_call.1} parent=35 // pred_check_branch
          %212 = sbr.rel (%p210) target = $region40
        $region39: #{tpu_custom_call.1} parent=35 // pred_region
          %213 = dma.done %s206, 128
        $region40: #{tpu_custom_call.1} parent=35 // pred_fallthru
          _
        // Predicated region
        $region41: #{tpu_custom_call.1} parent=35 // pred_check
          %p214 = pneg %p64
        $region42: #{tpu_custom_call.1} parent=35 // pred_check_branch
          %216 = sbr.rel (%p214) target = $region44
        $region43: #{tpu_custom_call.1} parent=35 // pred_region
          %217 = dma.done [#allocation6], 512
        $region44: #{tpu_custom_call.1} parent=35 // pred_fallthru
          _
        // Predicated region
        $region45: #{tpu_custom_call.1} parent=35 // pred_check
          %p218 = pneg %p85
        $region46: #{tpu_custom_call.1} parent=35 // pred_check_branch
          %220 = sbr.rel (%p218) target = $region48
        $region47: #{tpu_custom_call.1} parent=35 // pred_region
          %221 = dma.done [#allocation6], 512
        $region48: #{tpu_custom_call.1} parent=35 // pred_fallthru
          _
        %s222 = sand.u32 %s30, 1
        %s223 = scalar_lea.sflag [#allocation3], %s222
        %s224 = sand.u32 %s30, 1
        %s225 = smul.addr %s224, 8
        %s226 = scalar_lea.vmem [#allocation2], %s225
        %p227 = pneg %p43
        %p228 = pneg %p40
        %p229 = pneg %p64
        %p230 = pneg %p61
        %p231 = pneg %p85
        %p232 = pneg %p82
        %p233 = pneg %p106
        %p234 = pneg %p103
        %p235 = pneg %p132
        %p236 = pneg %p129
        %s237 = sand.u32 %s119, 1
        %s238 = scalar_lea.sflag [#allocation4], %s237
        %s239 = sand.u32 %s119, 1
        %s240 = smul.addr %s239, 8
        %s241 = scalar_lea.vmem [#allocation8], %s240
        %v242 = vld [vmem:[%s209] sm:$0xff]
        %v243 = vld [vmem:[#allocation5] sm:$0xff]
        %v244 = vld [vmem:[#allocation5 + $0x8] sm:$0xff]
        %v245 = vld [vmem:[#allocation5 + $0x10] sm:$0xff]
        %v246 = vld [vmem:[#allocation5 + $0x18] sm:$0xff]
        %vm247 = vcmask 261120
        %v249 = vsel %vm247, %v242, 0
        %251 = vmatprep.subr.mxu0 0.0
        %252 = vmatpush1.msra.mxu0 %v243
        %253 = vmatprep.subr.mxu0 0.0
        %254 = vmatpush1.msra.mxu0 %v244
        %255 = vmatprep.subr.mxu0 0.0
        %256 = vmatpush1.msra.mxu0 %v245
        %257 = vmatprep.subr.mxu0 0.0
        %258 = vmatpush1.msra.mxu0 %v246
        %259 = vmatprep.subr.mxu0 0.0
        %260 = vmatpush1.msra.mxu0 0.0
        %261 = vmatprep.subr.mxu0 0.0
        %262 = vmatpush1.msra.mxu0 0.0
        %263 = vmatprep.subr.mxu0 0.0
        %264 = vmatpush1.msra.mxu0 0.0
        %265 = vmatprep.subr.mxu0 0.0
        %266 = vmatpush1.msra.mxu0 0.0
        %267 = vmatprep.subr.mxu0 0.0
        %268 = vmatpush1.msra.mxu0 0.0
        %269 = vmatprep.subr.mxu0 0.0
        %270 = vmatpush1.msra.mxu0 0.0
        %271 = vmatprep.subr.mxu0 0.0
        %272 = vmatpush1.msra.mxu0 0.0
        %273 = vmatprep.subr.mxu0 0.0
        %274 = vmatpush1.msra.mxu0 0.0
        %275 = vmatprep.subr.mxu0 0.0
        %276 = vmatpush1.msra.mxu0 0.0
        %277 = vmatprep.subr.mxu0 0.0
        %278 = vmatpush1.msra.mxu0 0.0
        %279 = vmatprep.subr.mxu0 0.0
        %280 = vmatpush1.msra.mxu0 0.0
        %281 = vmatprep.subr.mxu0 0.0
        %282 = vmatpush1.msra.mxu0 0.0
        %283 = vmatprep.subr.mxu0 0.0
        %284 = vmatpush1.msra.mxu0 0.0
        %285 = vmatprep.subr.mxu0 0.0
        %286 = vmatpush1.msra.mxu0 0.0
        %287 = vmatprep.subr.mxu0 0.0
        %288 = vmatpush1.msra.mxu0 0.0
        %289 = vmatprep.subr.mxu0 0.0
        %290 = vmatpush1.msra.mxu0 0.0
        %291 = vmatprep.subr.mxu0 0.0
        %292 = vmatpush1.msra.mxu0 0.0
        %293 = vmatprep.subr.mxu0 0.0
        %294 = vmatpush1.msra.mxu0 0.0
        %295 = vmatprep.subr.mxu0 0.0
        %296 = vmatpush1.msra.mxu0 0.0
        %297 = vmatprep.subr.mxu0 0.0
        %298 = vmatpush1.msra.mxu0 0.0
        %299 = vmatprep.subr.mxu0 0.0
        %300 = vmatpush1.msra.mxu0 0.0
        %301 = vmatprep.subr.mxu0 0.0
        %302 = vmatpush1.msra.mxu0 0.0
        %303 = vmatprep.subr.mxu0 0.0
        %304 = vmatpush1.msra.mxu0 0.0
        %305 = vmatprep.subr.mxu0 0.0
        %306 = vmatpush1.msra.mxu0 0.0
        %307 = vmatprep.subr.mxu0 0.0
        %308 = vmatpush1.msra.mxu0 0.0
        %309 = vmatprep.subr.mxu0 0.0
        %310 = vmatpush1.msra.mxu0 0.0
        %311 = vmatprep.subr.mxu0 0.0
        %312 = vmatpush1.msra.mxu0 0.0
        %313 = vmatprep.subr.mxu0 0.0
        %314 = vmatpush1.msra.mxu0 0.0
        %315 = vmatprep.mubr.f32.mxu0 0.0
        %316 = vmatmul.mubr.f32.gmra.mrb[0].mxu0 %v249
        %v317 = vpop.f32.mrb[0].mxu0
        %v318 = vadd.f32 0.0, %v317
        %v319 = vpop.f32.mrb[0].mxu0
        %320 = vdwg.mxu0
        %322 = vrot.lane.b32.xlu0 %v318, 120
        %v323 = vpop.permute.xlu0 %322
        %324 = vrot.lane.b32.xlu0 %v318, 112
        %v325 = vpop.permute.xlu0 %324
        %326 = vrot.lane.b32.xlu0 %v318, 104
        %v327 = vpop.permute.xlu0 %326
        %328 = vrot.lane.b32.xlu0 %v318, 96
        %v329 = vpop.permute.xlu0 %328
        %vm330 = vcmask 64512
        %v331 = vsel %vm330, %v318, 0
        %v333 = vsel %vm330, %v329, 0
        %335 = vmatprep.subr.mxu0 0.0
        %336 = vmatpush1.xpose.msra.mxu0 %v333
        %337 = vmatprep.subr.mxu0 0.0
        %338 = vmatpush1.xpose.msra.mxu0 0.0
        %339 = vmatprep.subr.mxu0 0.0
        %340 = vmatpush1.xpose.msra.mxu0 0.0
        %341 = vmatprep.subr.mxu0 0.0
        %342 = vmatpush1.xpose.msra.mxu0 0.0
        %343 = vmatprep.subr.mxu0 0.0
        %344 = vmatpush1.xpose.msra.mxu0 0.0
        %345 = vmatprep.subr.mxu0 0.0
        %346 = vmatpush1.xpose.msra.mxu0 0.0
        %347 = vmatprep.subr.mxu0 0.0
        %348 = vmatpush1.xpose.msra.mxu0 0.0
        %349 = vmatprep.subr.mxu0 0.0
        %350 = vmatpush1.xpose.msra.mxu0 0.0
        %351 = vmatprep.subr.mxu0 0.0
        %352 = vmatpush1.xpose.msra.mxu0 0.0
        %353 = vmatprep.subr.mxu0 0.0
        %354 = vmatpush1.xpose.msra.mxu0 0.0
        %355 = vmatprep.subr.mxu0 0.0
        %356 = vmatpush1.xpose.msra.mxu0 0.0
        %357 = vmatprep.subr.mxu0 0.0
        %358 = vmatpush1.xpose.msra.mxu0 0.0
        %359 = vmatprep.subr.mxu0 0.0
        %360 = vmatpush1.xpose.msra.mxu0 0.0
        %361 = vmatprep.subr.mxu0 0.0
        %362 = vmatpush1.xpose.msra.mxu0 0.0
        %363 = vmatprep.subr.mxu0 0.0
        %364 = vmatpush1.xpose.msra.mxu0 0.0
        %365 = vmatprep.subr.mxu0 0.0
        %366 = vmatpush1.xpose.msra.mxu0 0.0
        %367 = vmatprep.subr.mxu0 0.0
        %368 = vmatpush1.xpose.msra.mxu0 0.0
        %369 = vmatprep.subr.mxu0 0.0
        %370 = vmatpush1.xpose.msra.mxu0 0.0
        %371 = vmatprep.subr.mxu0 0.0
        %372 = vmatpush1.xpose.msra.mxu0 0.0
        %373 = vmatprep.subr.mxu0 0.0
        %374 = vmatpush1.xpose.msra.mxu0 0.0
        %375 = vmatprep.subr.mxu0 0.0
        %376 = vmatpush1.xpose.msra.mxu0 0.0
        %377 = vmatprep.subr.mxu0 0.0
        %378 = vmatpush1.xpose.msra.mxu0 0.0
        %379 = vmatprep.subr.mxu0 0.0
        %380 = vmatpush1.xpose.msra.mxu0 0.0
        %381 = vmatprep.subr.mxu0 0.0
        %382 = vmatpush1.xpose.msra.mxu0 0.0
        %383 = vmatprep.subr.mxu0 0.0
        %384 = vmatpush1.xpose.msra.mxu0 0.0
        %385 = vmatprep.subr.mxu0 0.0
        %386 = vmatpush1.xpose.msra.mxu0 0.0
        %387 = vmatprep.subr.mxu0 0.0
        %388 = vmatpush1.xpose.msra.mxu0 0.0
        %389 = vmatprep.subr.mxu0 0.0
        %390 = vmatpush1.xpose.msra.mxu0 0.0
        %391 = vmatprep.subr.mxu0 0.0
        %392 = vmatpush1.xpose.msra.mxu0 0.0
        %393 = vmatprep.subr.mxu0 0.0
        %394 = vmatpush1.xpose.msra.mxu0 0.0
        %395 = vmatprep.subr.mxu0 0.0
        %396 = vmatpush1.xpose.msra.mxu0 0.0
        %397 = vmatprep.subr.mxu0 0.0
        %398 = vmatpush1.xpose.msra.mxu0 0.0
        %399 = vmatprep.mubr.f32.mxu0 0.0
        %400 = vmatmul.mubr.f32.gmra.mrb[0].mxu0 %v331
        %v401 = vpop.f32.mrb[0].mxu0
        %v402 = vadd.f32 0.0, %v401
        %v403 = vpop.f32.mrb[0].mxu0
        %404 = vdwg.mxu0
        %405 = vrot.lane.b32.xlu0 %v323, 96
        %v406 = vpop.permute.xlu0 %405
        %v407 = vsel %vm330, %v323, 0
        %v409 = vsel %vm330, %v406, 0
        %411 = vmatprep.subr.mxu0 0.0
        %412 = vmatpush1.xpose.msra.mxu0 %v409
        %413 = vmatprep.subr.mxu0 0.0
        %414 = vmatpush1.xpose.msra.mxu0 0.0
        %415 = vmatprep.subr.mxu0 0.0
        %416 = vmatpush1.xpose.msra.mxu0 0.0
        %417 = vmatprep.subr.mxu0 0.0
        %418 = vmatpush1.xpose.msra.mxu0 0.0
        %419 = vmatprep.subr.mxu0 0.0
        %420 = vmatpush1.xpose.msra.mxu0 0.0
        %421 = vmatprep.subr.mxu0 0.0
        %422 = vmatpush1.xpose.msra.mxu0 0.0
        %423 = vmatprep.subr.mxu0 0.0
        %424 = vmatpush1.xpose.msra.mxu0 0.0
        %425 = vmatprep.subr.mxu0 0.0
        %426 = vmatpush1.xpose.msra.mxu0 0.0
        %427 = vmatprep.subr.mxu0 0.0
        %428 = vmatpush1.xpose.msra.mxu0 0.0
        %429 = vmatprep.subr.mxu0 0.0
        %430 = vmatpush1.xpose.msra.mxu0 0.0
        %431 = vmatprep.subr.mxu0 0.0
        %432 = vmatpush1.xpose.msra.mxu0 0.0
        %433 = vmatprep.subr.mxu0 0.0
        %434 = vmatpush1.xpose.msra.mxu0 0.0
        %435 = vmatprep.subr.mxu0 0.0
        %436 = vmatpush1.xpose.msra.mxu0 0.0
        %437 = vmatprep.subr.mxu0 0.0
        %438 = vmatpush1.xpose.msra.mxu0 0.0
        %439 = vmatprep.subr.mxu0 0.0
        %440 = vmatpush1.xpose.msra.mxu0 0.0
        %441 = vmatprep.subr.mxu0 0.0
        %442 = vmatpush1.xpose.msra.mxu0 0.0
        %443 = vmatprep.subr.mxu0 0.0
        %444 = vmatpush1.xpose.msra.mxu0 0.0
        %445 = vmatprep.subr.mxu0 0.0
        %446 = vmatpush1.xpose.msra.mxu0 0.0
        %447 = vmatprep.subr.mxu0 0.0
        %448 = vmatpush1.xpose.msra.mxu0 0.0
        %449 = vmatprep.subr.mxu0 0.0
        %450 = vmatpush1.xpose.msra.mxu0 0.0
        %451 = vmatprep.subr.mxu0 0.0
        %452 = vmatpush1.xpose.msra.mxu0 0.0
        %453 = vmatprep.subr.mxu0 0.0
        %454 = vmatpush1.xpose.msra.mxu0 0.0
        %455 = vmatprep.subr.mxu0 0.0
        %456 = vmatpush1.xpose.msra.mxu0 0.0
        %457 = vmatprep.subr.mxu0 0.0
        %458 = vmatpush1.xpose.msra.mxu0 0.0
        %459 = vmatprep.subr.mxu0 0.0
        %460 = vmatpush1.xpose.msra.mxu0 0.0
        %461 = vmatprep.subr.mxu0 0.0
        %462 = vmatpush1.xpose.msra.mxu0 0.0
        %463 = vmatprep.subr.mxu0 0.0
        %464 = vmatpush1.xpose.msra.mxu0 0.0
        %465 = vmatprep.subr.mxu0 0.0
        %466 = vmatpush1.xpose.msra.mxu0 0.0
        %467 = vmatprep.subr.mxu0 0.0
        %468 = vmatpush1.xpose.msra.mxu0 0.0
        %469 = vmatprep.subr.mxu0 0.0
        %470 = vmatpush1.xpose.msra.mxu0 0.0
        %471 = vmatprep.subr.mxu0 0.0
        %472 = vmatpush1.xpose.msra.mxu0 0.0
        %473 = vmatprep.subr.mxu0 0.0
        %474 = vmatpush1.xpose.msra.mxu0 0.0
        %475 = vmatprep.mubr.f32.mxu0 0.0
        %476 = vmatmul.mubr.f32.gmra.mrb[0].mxu0 %v407
        %v477 = vpop.f32.mrb[0].mxu0
        %v478 = vadd.f32 0.0, %v477
        %v479 = vpop.f32.mrb[0].mxu0
        %480 = vdwg.mxu0
        %481 = vrot.lane.b32.xlu0 %v325, 96
        %v482 = vpop.permute.xlu0 %481
        %v483 = vsel %vm330, %v325, 0
        %v485 = vsel %vm330, %v482, 0
        %487 = vmatprep.subr.mxu0 0.0
        %488 = vmatpush1.xpose.msra.mxu0 %v485
        %489 = vmatprep.subr.mxu0 0.0
        %490 = vmatpush1.xpose.msra.mxu0 0.0
        %491 = vmatprep.subr.mxu0 0.0
        %492 = vmatpush1.xpose.msra.mxu0 0.0
        %493 = vmatprep.subr.mxu0 0.0
        %494 = vmatpush1.xpose.msra.mxu0 0.0
        %495 = vmatprep.subr.mxu0 0.0
        %496 = vmatpush1.xpose.msra.mxu0 0.0
        %497 = vmatprep.subr.mxu0 0.0
        %498 = vmatpush1.xpose.msra.mxu0 0.0
        %499 = vmatprep.subr.mxu0 0.0
        %500 = vmatpush1.xpose.msra.mxu0 0.0
        %501 = vmatprep.subr.mxu0 0.0
        %502 = vmatpush1.xpose.msra.mxu0 0.0
        %503 = vmatprep.subr.mxu0 0.0
        %504 = vmatpush1.xpose.msra.mxu0 0.0
        %505 = vmatprep.subr.mxu0 0.0
        %506 = vmatpush1.xpose.msra.mxu0 0.0
        %507 = vmatprep.subr.mxu0 0.0
        %508 = vmatpush1.xpose.msra.mxu0 0.0
        %509 = vmatprep.subr.mxu0 0.0
        %510 = vmatpush1.xpose.msra.mxu0 0.0
        %511 = vmatprep.subr.mxu0 0.0
        %512 = vmatpush1.xpose.msra.mxu0 0.0
        %513 = vmatprep.subr.mxu0 0.0
        %514 = vmatpush1.xpose.msra.mxu0 0.0
        %515 = vmatprep.subr.mxu0 0.0
        %516 = vmatpush1.xpose.msra.mxu0 0.0
        %517 = vmatprep.subr.mxu0 0.0
        %518 = vmatpush1.xpose.msra.mxu0 0.0
        %519 = vmatprep.subr.mxu0 0.0
        %520 = vmatpush1.xpose.msra.mxu0 0.0
        %521 = vmatprep.subr.mxu0 0.0
        %522 = vmatpush1.xpose.msra.mxu0 0.0
        %523 = vmatprep.subr.mxu0 0.0
        %524 = vmatpush1.xpose.msra.mxu0 0.0
        %525 = vmatprep.subr.mxu0 0.0
        %526 = vmatpush1.xpose.msra.mxu0 0.0
        %527 = vmatprep.subr.mxu0 0.0
        %528 = vmatpush1.xpose.msra.mxu0 0.0
        %529 = vmatprep.subr.mxu0 0.0
        %530 = vmatpush1.xpose.msra.mxu0 0.0
        %531 = vmatprep.subr.mxu0 0.0
        %532 = vmatpush1.xpose.msra.mxu0 0.0
        %533 = vmatprep.subr.mxu0 0.0
        %534 = vmatpush1.xpose.msra.mxu0 0.0
        %535 = vmatprep.subr.mxu0 0.0
        %536 = vmatpush1.xpose.msra.mxu0 0.0
        %537 = vmatprep.subr.mxu0 0.0
        %538 = vmatpush1.xpose.msra.mxu0 0.0
        %539 = vmatprep.subr.mxu0 0.0
        %540 = vmatpush1.xpose.msra.mxu0 0.0
        %541 = vmatprep.subr.mxu0 0.0
        %542 = vmatpush1.xpose.msra.mxu0 0.0
        %543 = vmatprep.subr.mxu0 0.0
        %544 = vmatpush1.xpose.msra.mxu0 0.0
        %545 = vmatprep.subr.mxu0 0.0
        %546 = vmatpush1.xpose.msra.mxu0 0.0
        %547 = vmatprep.subr.mxu0 0.0
        %548 = vmatpush1.xpose.msra.mxu0 0.0
        %549 = vmatprep.subr.mxu0 0.0
        %550 = vmatpush1.xpose.msra.mxu0 0.0
        %551 = vmatprep.mubr.f32.mxu0 0.0
        %552 = vmatmul.mubr.f32.gmra.mrb[0].mxu0 %v483
        %v553 = vpop.f32.mrb[0].mxu0
        %v554 = vadd.f32 0.0, %v553
        %v555 = vpop.f32.mrb[0].mxu0
        %556 = vdwg.mxu0
        %557 = vrot.lane.b32.xlu0 %v327, 96
        %v558 = vpop.permute.xlu0 %557
        %v559 = vsel %vm330, %v327, 0
        %v561 = vsel %vm330, %v558, 0
        %563 = vmatprep.subr.mxu0 0.0
        %564 = vmatpush1.xpose.msra.mxu0 %v561
        %565 = vmatprep.subr.mxu0 0.0
        %566 = vmatpush1.xpose.msra.mxu0 0.0
        %567 = vmatprep.subr.mxu0 0.0
        %568 = vmatpush1.xpose.msra.mxu0 0.0
        %569 = vmatprep.subr.mxu0 0.0
        %570 = vmatpush1.xpose.msra.mxu0 0.0
        %571 = vmatprep.subr.mxu0 0.0
        %572 = vmatpush1.xpose.msra.mxu0 0.0
        %573 = vmatprep.subr.mxu0 0.0
        %574 = vmatpush1.xpose.msra.mxu0 0.0
        %575 = vmatprep.subr.mxu0 0.0
        %576 = vmatpush1.xpose.msra.mxu0 0.0
        %577 = vmatprep.subr.mxu0 0.0
        %578 = vmatpush1.xpose.msra.mxu0 0.0
        %579 = vmatprep.subr.mxu0 0.0
        %580 = vmatpush1.xpose.msra.mxu0 0.0
        %581 = vmatprep.subr.mxu0 0.0
        %582 = vmatpush1.xpose.msra.mxu0 0.0
        %583 = vmatprep.subr.mxu0 0.0
        %584 = vmatpush1.xpose.msra.mxu0 0.0
        %585 = vmatprep.subr.mxu0 0.0
        %586 = vmatpush1.xpose.msra.mxu0 0.0
        %587 = vmatprep.subr.mxu0 0.0
        %588 = vmatpush1.xpose.msra.mxu0 0.0
        %589 = vmatprep.subr.mxu0 0.0
        %590 = vmatpush1.xpose.msra.mxu0 0.0
        %591 = vmatprep.subr.mxu0 0.0
        %592 = vmatpush1.xpose.msra.mxu0 0.0
        %593 = vmatprep.subr.mxu0 0.0
        %594 = vmatpush1.xpose.msra.mxu0 0.0
        %595 = vmatprep.subr.mxu0 0.0
        %596 = vmatpush1.xpose.msra.mxu0 0.0
        %597 = vmatprep.subr.mxu0 0.0
        %598 = vmatpush1.xpose.msra.mxu0 0.0
        %599 = vmatprep.subr.mxu0 0.0
        %600 = vmatpush1.xpose.msra.mxu0 0.0
        %601 = vmatprep.subr.mxu0 0.0
        %602 = vmatpush1.xpose.msra.mxu0 0.0
        %603 = vmatprep.subr.mxu0 0.0
        %604 = vmatpush1.xpose.msra.mxu0 0.0
        %605 = vmatprep.subr.mxu0 0.0
        %606 = vmatpush1.xpose.msra.mxu0 0.0
        %607 = vmatprep.subr.mxu0 0.0
        %608 = vmatpush1.xpose.msra.mxu0 0.0
        %609 = vmatprep.subr.mxu0 0.0
        %610 = vmatpush1.xpose.msra.mxu0 0.0
        %611 = vmatprep.subr.mxu0 0.0
        %612 = vmatpush1.xpose.msra.mxu0 0.0
        %613 = vmatprep.subr.mxu0 0.0
        %614 = vmatpush1.xpose.msra.mxu0 0.0
        %615 = vmatprep.subr.mxu0 0.0
        %616 = vmatpush1.xpose.msra.mxu0 0.0
        %617 = vmatprep.subr.mxu0 0.0
        %618 = vmatpush1.xpose.msra.mxu0 0.0
        %619 = vmatprep.subr.mxu0 0.0
        %620 = vmatpush1.xpose.msra.mxu0 0.0
        %621 = vmatprep.subr.mxu0 0.0
        %622 = vmatpush1.xpose.msra.mxu0 0.0
        %623 = vmatprep.subr.mxu0 0.0
        %624 = vmatpush1.xpose.msra.mxu0 0.0
        %625 = vmatprep.subr.mxu0 0.0
        %626 = vmatpush1.xpose.msra.mxu0 0.0
        %627 = vmatprep.mubr.f32.mxu0 0.0
        %628 = vmatmul.mubr.f32.gmra.mrb[0].mxu0 %v559
        %v629 = vpop.f32.mrb[0].mxu0
        %v630 = vadd.f32 0.0, %v629
        %v631 = vpop.f32.mrb[0].mxu0
        %632 = vdwg.mxu0
        %v633 = vsel %vm330, %v402, -inf
        %634 = vmax.xlane.f32.xlu0 %v633
        %v635 = vpop.xlane.xlu0 %634
        %v636 = vsel %vm330, %v478, -inf
        %637 = vmax.xlane.f32.xlu0 %v636
        %v638 = vpop.xlane.xlu0 %637
        %v639 = vsel %vm330, %v554, -inf
        %640 = vmax.xlane.f32.xlu0 %v639
        %v641 = vpop.xlane.xlu0 %640
        %v642 = vsel %vm330, %v630, -inf
        %643 = vmax.xlane.f32.xlu0 %v642
        %v644 = vpop.xlane.xlu0 %643
        %v645 = vsub.f32 %v402, %v635
        %v646 = vsub.f32 %v478, %v638
        %v647 = vsub.f32 %v554, %v641
        %v648 = vsub.f32 %v630, %v644
        %v649 = vmul.f32 %v645, 1.442695
        %v650 = vpow.pop %v649
        %v651 = vmul.f32 %v646, 1.442695
        %v652 = vpow.pop %v651
        %v653 = vmul.f32 %v647, 1.442695
        %v654 = vpow.pop %v653
        %v655 = vmul.f32 %v648, 1.442695
        %v656 = vpow.pop %v655
        %v657 = vsel %vm330, %v650, 0.0
        %658 = vadd.xlane.f32.xlu0 %v657
        %v659 = vpop.xlane.xlu0 %658
        %v660 = vsel %vm330, %v652, 0.0
        %661 = vadd.xlane.f32.xlu0 %v660
        %v662 = vpop.xlane.xlu0 %661
        %v663 = vsel %vm330, %v654, 0.0
        %664 = vadd.xlane.f32.xlu0 %v663
        %v665 = vpop.xlane.xlu0 %664
        %v666 = vsel %vm330, %v656, 0.0
        %667 = vadd.xlane.f32.xlu0 %v666
        %v668 = vpop.xlane.xlu0 %667
        %v669 = vrcp.pop %v659
        %v670 = vrcp.pop %v662
        %v671 = vrcp.pop %v665
        %v672 = vrcp.pop %v668
        %v673 = vmul.f32 %v650, %v669
        %v674 = vmul.f32 %v652, %v670
        %v675 = vmul.f32 %v654, %v671
        %v676 = vmul.f32 %v656, %v672
        %677 = vrot.lane.b32.xlu0 %v318, 64
        %v678 = vpop.permute.xlu0 %677
        %v681 = vsel %vm330, %v673, 0
        %683 = vmatprep.subr.mxu0 0.0
        %684 = vmatpush1.msra.mxu0 %v678
        %685 = vmatprep.subr.mxu0 0.0
        %686 = vmatpush1.msra.mxu0 0.0
        %687 = vmatprep.subr.mxu0 0.0
        %688 = vmatpush1.msra.mxu0 0.0
        %689 = vmatprep.subr.mxu0 0.0
        %690 = vmatpush1.msra.mxu0 0.0
        %691 = vmatprep.subr.mxu0 0.0
        %692 = vmatpush1.msra.mxu0 0.0
        %693 = vmatprep.subr.mxu0 0.0
        %694 = vmatpush1.msra.mxu0 0.0
        %695 = vmatprep.subr.mxu0 0.0
        %696 = vmatpush1.msra.mxu0 0.0
        %697 = vmatprep.subr.mxu0 0.0
        %698 = vmatpush1.msra.mxu0 0.0
        %699 = vmatprep.subr.mxu0 0.0
        %700 = vmatpush1.msra.mxu0 0.0
        %701 = vmatprep.subr.mxu0 0.0
        %702 = vmatpush1.msra.mxu0 0.0
        %703 = vmatprep.subr.mxu0 0.0
        %704 = vmatpush1.msra.mxu0 0.0
        %705 = vmatprep.subr.mxu0 0.0
        %706 = vmatpush1.msra.mxu0 0.0
        %707 = vmatprep.subr.mxu0 0.0
        %708 = vmatpush1.msra.mxu0 0.0
        %709 = vmatprep.subr.mxu0 0.0
        %710 = vmatpush1.msra.mxu0 0.0
        %711 = vmatprep.subr.mxu0 0.0
        %712 = vmatpush1.msra.mxu0 0.0
        %713 = vmatprep.subr.mxu0 0.0
        %714 = vmatpush1.msra.mxu0 0.0
        %715 = vmatprep.subr.mxu0 0.0
        %716 = vmatpush1.msra.mxu0 0.0
        %717 = vmatprep.subr.mxu0 0.0
        %718 = vmatpush1.msra.mxu0 0.0
        %719 = vmatprep.subr.mxu0 0.0
        %720 = vmatpush1.msra.mxu0 0.0
        %721 = vmatprep.subr.mxu0 0.0
        %722 = vmatpush1.msra.mxu0 0.0
        %723 = vmatprep.subr.mxu0 0.0
        %724 = vmatpush1.msra.mxu0 0.0
        %725 = vmatprep.subr.mxu0 0.0
        %726 = vmatpush1.msra.mxu0 0.0
        %727 = vmatprep.subr.mxu0 0.0
        %728 = vmatpush1.msra.mxu0 0.0
        %729 = vmatprep.subr.mxu0 0.0
        %730 = vmatpush1.msra.mxu0 0.0
        %731 = vmatprep.subr.mxu0 0.0
        %732 = vmatpush1.msra.mxu0 0.0
        %733 = vmatprep.subr.mxu0 0.0
        %734 = vmatpush1.msra.mxu0 0.0
        %735 = vmatprep.subr.mxu0 0.0
        %736 = vmatpush1.msra.mxu0 0.0
        %737 = vmatprep.subr.mxu0 0.0
        %738 = vmatpush1.msra.mxu0 0.0
        %739 = vmatprep.subr.mxu0 0.0
        %740 = vmatpush1.msra.mxu0 0.0
        %741 = vmatprep.subr.mxu0 0.0
        %742 = vmatpush1.msra.mxu0 0.0
        %743 = vmatprep.subr.mxu0 0.0
        %744 = vmatpush1.msra.mxu0 0.0
        %745 = vmatprep.subr.mxu0 0.0
        %746 = vmatpush1.msra.mxu0 0.0
        %747 = vmatprep.mubr.f32.mxu0 0.0
        %748 = vmatmul.mubr.f32.gmra.mrb[0].mxu0 %v681
        %v749 = vpop.f32.mrb[0].mxu0
        %v750 = vadd.f32 0.0, %v749
        %v751 = vpop.f32.mrb[0].mxu0
        %752 = vdwg.mxu0
        %753 = vrot.lane.b32.xlu0 %v323, 64
        %v754 = vpop.permute.xlu0 %753
        %v757 = vsel %vm330, %v674, 0
        %759 = vmatprep.subr.mxu0 0.0
        %760 = vmatpush1.msra.mxu0 %v754
        %761 = vmatprep.subr.mxu0 0.0
        %762 = vmatpush1.msra.mxu0 0.0
        %763 = vmatprep.subr.mxu0 0.0
        %764 = vmatpush1.msra.mxu0 0.0
        %765 = vmatprep.subr.mxu0 0.0
        %766 = vmatpush1.msra.mxu0 0.0
        %767 = vmatprep.subr.mxu0 0.0
        %768 = vmatpush1.msra.mxu0 0.0
        %769 = vmatprep.subr.mxu0 0.0
        %770 = vmatpush1.msra.mxu0 0.0
        %771 = vmatprep.subr.mxu0 0.0
        %772 = vmatpush1.msra.mxu0 0.0
        %773 = vmatprep.subr.mxu0 0.0
        %774 = vmatpush1.msra.mxu0 0.0
        %775 = vmatprep.subr.mxu0 0.0
        %776 = vmatpush1.msra.mxu0 0.0
        %777 = vmatprep.subr.mxu0 0.0
        %778 = vmatpush1.msra.mxu0 0.0
        %779 = vmatprep.subr.mxu0 0.0
        %780 = vmatpush1.msra.mxu0 0.0
        %781 = vmatprep.subr.mxu0 0.0
        %782 = vmatpush1.msra.mxu0 0.0
        %783 = vmatprep.subr.mxu0 0.0
        %784 = vmatpush1.msra.mxu0 0.0
        %785 = vmatprep.subr.mxu0 0.0
        %786 = vmatpush1.msra.mxu0 0.0
        %787 = vmatprep.subr.mxu0 0.0
        %788 = vmatpush1.msra.mxu0 0.0
        %789 = vmatprep.subr.mxu0 0.0
        %790 = vmatpush1.msra.mxu0 0.0
        %791 = vmatprep.subr.mxu0 0.0
        %792 = vmatpush1.msra.mxu0 0.0
        %793 = vmatprep.subr.mxu0 0.0
        %794 = vmatpush1.msra.mxu0 0.0
        %795 = vmatprep.subr.mxu0 0.0
        %796 = vmatpush1.msra.mxu0 0.0
        %797 = vmatprep.subr.mxu0 0.0
        %798 = vmatpush1.msra.mxu0 0.0
        %799 = vmatprep.subr.mxu0 0.0
        %800 = vmatpush1.msra.mxu0 0.0
        %801 = vmatprep.subr.mxu0 0.0
        %802 = vmatpush1.msra.mxu0 0.0
        %803 = vmatprep.subr.mxu0 0.0
        %804 = vmatpush1.msra.mxu0 0.0
        %805 = vmatprep.subr.mxu0 0.0
        %806 = vmatpush1.msra.mxu0 0.0
        %807 = vmatprep.subr.mxu0 0.0
        %808 = vmatpush1.msra.mxu0 0.0
        %809 = vmatprep.subr.mxu0 0.0
        %810 = vmatpush1.msra.mxu0 0.0
        %811 = vmatprep.subr.mxu0 0.0
        %812 = vmatpush1.msra.mxu0 0.0
        %813 = vmatprep.subr.mxu0 0.0
        %814 = vmatpush1.msra.mxu0 0.0
        %815 = vmatprep.subr.mxu0 0.0
        %816 = vmatpush1.msra.mxu0 0.0
        %817 = vmatprep.subr.mxu0 0.0
        %818 = vmatpush1.msra.mxu0 0.0
        %819 = vmatprep.subr.mxu0 0.0
        %820 = vmatpush1.msra.mxu0 0.0
        %821 = vmatprep.subr.mxu0 0.0
        %822 = vmatpush1.msra.mxu0 0.0
        %823 = vmatprep.mubr.f32.mxu0 0.0
        %824 = vmatmul.mubr.f32.gmra.mrb[0].mxu0 %v757
        %v825 = vpop.f32.mrb[0].mxu0
        %v826 = vadd.f32 0.0, %v825
        %v827 = vpop.f32.mrb[0].mxu0
        %828 = vdwg.mxu0
        %829 = vrot.lane.b32.xlu0 %v325, 64
        %v830 = vpop.permute.xlu0 %829
        %v833 = vsel %vm330, %v675, 0
        %835 = vmatprep.subr.mxu0 0.0
        %836 = vmatpush1.msra.mxu0 %v830
        %837 = vmatprep.subr.mxu0 0.0
        %838 = vmatpush1.msra.mxu0 0.0
        %839 = vmatprep.subr.mxu0 0.0
        %840 = vmatpush1.msra.mxu0 0.0
        %841 = vmatprep.subr.mxu0 0.0
        %842 = vmatpush1.msra.mxu0 0.0
        %843 = vmatprep.subr.mxu0 0.0
        %844 = vmatpush1.msra.mxu0 0.0
        %845 = vmatprep.subr.mxu0 0.0
        %846 = vmatpush1.msra.mxu0 0.0
        %847 = vmatprep.subr.mxu0 0.0
        %848 = vmatpush1.msra.mxu0 0.0
        %849 = vmatprep.subr.mxu0 0.0
        %850 = vmatpush1.msra.mxu0 0.0
        %851 = vmatprep.subr.mxu0 0.0
        %852 = vmatpush1.msra.mxu0 0.0
        %853 = vmatprep.subr.mxu0 0.0
        %854 = vmatpush1.msra.mxu0 0.0
        %855 = vmatprep.subr.mxu0 0.0
        %856 = vmatpush1.msra.mxu0 0.0
        %857 = vmatprep.subr.mxu0 0.0
        %858 = vmatpush1.msra.mxu0 0.0
        %859 = vmatprep.subr.mxu0 0.0
        %860 = vmatpush1.msra.mxu0 0.0
        %861 = vmatprep.subr.mxu0 0.0
        %862 = vmatpush1.msra.mxu0 0.0
        %863 = vmatprep.subr.mxu0 0.0
        %864 = vmatpush1.msra.mxu0 0.0
        %865 = vmatprep.subr.mxu0 0.0
        %866 = vmatpush1.msra.mxu0 0.0
        %867 = vmatprep.subr.mxu0 0.0
        %868 = vmatpush1.msra.mxu0 0.0
        %869 = vmatprep.subr.mxu0 0.0
        %870 = vmatpush1.msra.mxu0 0.0
        %871 = vmatprep.subr.mxu0 0.0
        %872 = vmatpush1.msra.mxu0 0.0
        %873 = vmatprep.subr.mxu0 0.0
        %874 = vmatpush1.msra.mxu0 0.0
        %875 = vmatprep.subr.mxu0 0.0
        %876 = vmatpush1.msra.mxu0 0.0
        %877 = vmatprep.subr.mxu0 0.0
        %878 = vmatpush1.msra.mxu0 0.0
        %879 = vmatprep.subr.mxu0 0.0
        %880 = vmatpush1.msra.mxu0 0.0
        %881 = vmatprep.subr.mxu0 0.0
        %882 = vmatpush1.msra.mxu0 0.0
        %883 = vmatprep.subr.mxu0 0.0
        %884 = vmatpush1.msra.mxu0 0.0
        %885 = vmatprep.subr.mxu0 0.0
        %886 = vmatpush1.msra.mxu0 0.0
        %887 = vmatprep.subr.mxu0 0.0
        %888 = vmatpush1.msra.mxu0 0.0
        %889 = vmatprep.subr.mxu0 0.0
        %890 = vmatpush1.msra.mxu0 0.0
        %891 = vmatprep.subr.mxu0 0.0
        %892 = vmatpush1.msra.mxu0 0.0
        %893 = vmatprep.subr.mxu0 0.0
        %894 = vmatpush1.msra.mxu0 0.0
        %895 = vmatprep.subr.mxu0 0.0
        %896 = vmatpush1.msra.mxu0 0.0
        %897 = vmatprep.subr.mxu0 0.0
        %898 = vmatpush1.msra.mxu0 0.0
        %899 = vmatprep.mubr.f32.mxu0 0.0
        %900 = vmatmul.mubr.f32.gmra.mrb[0].mxu0 %v833
        %v901 = vpop.f32.mrb[0].mxu0
        %v902 = vadd.f32 0.0, %v901
        %v903 = vpop.f32.mrb[0].mxu0
        %904 = vdwg.mxu0
        %905 = vrot.lane.b32.xlu0 %v327, 64
        %v906 = vpop.permute.xlu0 %905
        %v909 = vsel %vm330, %v676, 0
        %911 = vmatprep.subr.mxu0 0.0
        %912 = vmatpush1.msra.mxu0 %v906
        %913 = vmatprep.subr.mxu0 0.0
        %914 = vmatpush1.msra.mxu0 0.0
        %915 = vmatprep.subr.mxu0 0.0
        %916 = vmatpush1.msra.mxu0 0.0
        %917 = vmatprep.subr.mxu0 0.0
        %918 = vmatpush1.msra.mxu0 0.0
        %919 = vmatprep.subr.mxu0 0.0
        %920 = vmatpush1.msra.mxu0 0.0
        %921 = vmatprep.subr.mxu0 0.0
        %922 = vmatpush1.msra.mxu0 0.0
        %923 = vmatprep.subr.mxu0 0.0
        %924 = vmatpush1.msra.mxu0 0.0
        %925 = vmatprep.subr.mxu0 0.0
        %926 = vmatpush1.msra.mxu0 0.0
        %927 = vmatprep.subr.mxu0 0.0
        %928 = vmatpush1.msra.mxu0 0.0
        %929 = vmatprep.subr.mxu0 0.0
        %930 = vmatpush1.msra.mxu0 0.0
        %931 = vmatprep.subr.mxu0 0.0
        %932 = vmatpush1.msra.mxu0 0.0
        %933 = vmatprep.subr.mxu0 0.0
        %934 = vmatpush1.msra.mxu0 0.0
        %935 = vmatprep.subr.mxu0 0.0
        %936 = vmatpush1.msra.mxu0 0.0
        %937 = vmatprep.subr.mxu0 0.0
        %938 = vmatpush1.msra.mxu0 0.0
        %939 = vmatprep.subr.mxu0 0.0
        %940 = vmatpush1.msra.mxu0 0.0
        %941 = vmatprep.subr.mxu0 0.0
        %942 = vmatpush1.msra.mxu0 0.0
        %943 = vmatprep.subr.mxu0 0.0
        %944 = vmatpush1.msra.mxu0 0.0
        %945 = vmatprep.subr.mxu0 0.0
        %946 = vmatpush1.msra.mxu0 0.0
        %947 = vmatprep.subr.mxu0 0.0
        %948 = vmatpush1.msra.mxu0 0.0
        %949 = vmatprep.subr.mxu0 0.0
        %950 = vmatpush1.msra.mxu0 0.0
        %951 = vmatprep.subr.mxu0 0.0
        %952 = vmatpush1.msra.mxu0 0.0
        %953 = vmatprep.subr.mxu0 0.0
        %954 = vmatpush1.msra.mxu0 0.0
        %955 = vmatprep.subr.mxu0 0.0
        %956 = vmatpush1.msra.mxu0 0.0
        %957 = vmatprep.subr.mxu0 0.0
        %958 = vmatpush1.msra.mxu0 0.0
        %959 = vmatprep.subr.mxu0 0.0
        %960 = vmatpush1.msra.mxu0 0.0
        %961 = vmatprep.subr.mxu0 0.0
        %962 = vmatpush1.msra.mxu0 0.0
        %963 = vmatprep.subr.mxu0 0.0
        %964 = vmatpush1.msra.mxu0 0.0
        %965 = vmatprep.subr.mxu0 0.0
        %966 = vmatpush1.msra.mxu0 0.0
        %967 = vmatprep.subr.mxu0 0.0
        %968 = vmatpush1.msra.mxu0 0.0
        %969 = vmatprep.subr.mxu0 0.0
        %970 = vmatpush1.msra.mxu0 0.0
        %971 = vmatprep.subr.mxu0 0.0
        %972 = vmatpush1.msra.mxu0 0.0
        %973 = vmatprep.subr.mxu0 0.0
        %974 = vmatpush1.msra.mxu0 0.0
        %975 = vmatprep.mubr.f32.mxu0 0.0
        %976 = vmatmul.mubr.f32.gmra.mrb[0].mxu0 %v909
        %v977 = vpop.f32.mrb[0].mxu0
        %v978 = vadd.f32 0.0, %v977
        %v979 = vpop.f32.mrb[0].mxu0
        %980 = vdwg.mxu0
        %982 = vrot.lane.b32.xlu0 %v826, 8
        %v983 = vpop.permute.xlu0 %982
        %986 = vrot.lane.b32.xlu0 %v902, 16
        %v987 = vpop.permute.xlu0 %986
        %990 = vrot.lane.b32.xlu0 %v978, 24
        %v991 = vpop.permute.xlu0 %990
        %v993 = vsel %vm330, %v750, %v983
        %vm994 = vcmask 130048
        %v995 = vsel %vm994, %v993, %v987
        %vm996 = vcmask 195584
        %v997 = vsel %vm996, %v995, %v991
        %v998 = vld [vmem:[#allocation7] sm:$0xff]
        %v999 = vld [vmem:[#allocation7 + $0x8] sm:$0xff]
        %v1000 = vld [vmem:[#allocation7 + $0x10] sm:$0xff]
        %v1001 = vld [vmem:[#allocation7 + $0x18] sm:$0xff]
        %v1002 = vld [vmem:[%s3] sm:$0x1]
        %v1004 = vlaneseq
        %v1005 = vshrl.u32 %v1004, 7
        %v1006 = vsub.s32 0, %v1005
        %v1007 = vrot.slane %v1002, %v1006
        %v1010 = vsel %vm247, %v997, 0
        %1012 = vmatprep.subr.mxu0 0.0
        %1013 = vmatpush1.msra.mxu0 %v998
        %1014 = vmatprep.subr.mxu0 0.0
        %1015 = vmatpush1.msra.mxu0 %v999
        %1016 = vmatprep.subr.mxu0 0.0
        %1017 = vmatpush1.msra.mxu0 %v1000
        %1018 = vmatprep.subr.mxu0 0.0
        %1019 = vmatpush1.msra.mxu0 %v1001
        %1020 = vmatprep.subr.mxu0 0.0
        %1021 = vmatpush1.msra.mxu0 0.0
        %1022 = vmatprep.subr.mxu0 0.0
        %1023 = vmatpush1.msra.mxu0 0.0
        %1024 = vmatprep.subr.mxu0 0.0
        %1025 = vmatpush1.msra.mxu0 0.0
        %1026 = vmatprep.subr.mxu0 0.0
        %1027 = vmatpush1.msra.mxu0 0.0
        %1028 = vmatprep.subr.mxu0 0.0
        %1029 = vmatpush1.msra.mxu0 0.0
        %1030 = vmatprep.subr.mxu0 0.0
        %1031 = vmatpush1.msra.mxu0 0.0
        %1032 = vmatprep.subr.mxu0 0.0
        %1033 = vmatpush1.msra.mxu0 0.0
        %1034 = vmatprep.subr.mxu0 0.0
        %1035 = vmatpush1.msra.mxu0 0.0
        %1036 = vmatprep.subr.mxu0 0.0
        %1037 = vmatpush1.msra.mxu0 0.0
        %1038 = vmatprep.subr.mxu0 0.0
        %1039 = vmatpush1.msra.mxu0 0.0
        %1040 = vmatprep.subr.mxu0 0.0
        %1041 = vmatpush1.msra.mxu0 0.0
        %1042 = vmatprep.subr.mxu0 0.0
        %1043 = vmatpush1.msra.mxu0 0.0
        %1044 = vmatprep.subr.mxu0 0.0
        %1045 = vmatpush1.msra.mxu0 0.0
        %1046 = vmatprep.subr.mxu0 0.0
        %1047 = vmatpush1.msra.mxu0 0.0
        %1048 = vmatprep.subr.mxu0 0.0
        %1049 = vmatpush1.msra.mxu0 0.0
        %1050 = vmatprep.subr.mxu0 0.0
        %1051 = vmatpush1.msra.mxu0 0.0
        %1052 = vmatprep.subr.mxu0 0.0
        %1053 = vmatpush1.msra.mxu0 0.0
        %1054 = vmatprep.subr.mxu0 0.0
        %1055 = vmatpush1.msra.mxu0 0.0
        %1056 = vmatprep.subr.mxu0 0.0
        %1057 = vmatpush1.msra.mxu0 0.0
        %1058 = vmatprep.subr.mxu0 0.0
        %1059 = vmatpush1.msra.mxu0 0.0
        %1060 = vmatprep.subr.mxu0 0.0
        %1061 = vmatpush1.msra.mxu0 0.0
        %1062 = vmatprep.subr.mxu0 0.0
        %1063 = vmatpush1.msra.mxu0 0.0
        %1064 = vmatprep.subr.mxu0 0.0
        %1065 = vmatpush1.msra.mxu0 0.0
        %1066 = vmatprep.subr.mxu0 0.0
        %1067 = vmatpush1.msra.mxu0 0.0
        %1068 = vmatprep.subr.mxu0 0.0
        %1069 = vmatpush1.msra.mxu0 0.0
        %1070 = vmatprep.subr.mxu0 0.0
        %1071 = vmatpush1.msra.mxu0 0.0
        %1072 = vmatprep.subr.mxu0 0.0
        %1073 = vmatpush1.msra.mxu0 0.0
        %1074 = vmatprep.subr.mxu0 0.0
        %1075 = vmatpush1.msra.mxu0 0.0
        %1076 = vmatprep.mubr.f32.mxu0 0.0
        %1077 = vmatmul.mubr.f32.gmra.mrb[0].mxu0 %v1010
        %v1078 = vpop.f32.mrb[0].mxu0
        %v1079 = vadd.f32 %v1007, %v1078
        %v1080 = vpop.f32.mrb[0].mxu0
        %1081 = vdwg.mxu0
        %1082 = vst.msk [vmem:[%s241] sm:$0xff] %vm247, %v1079
        %s1083 = sand.u32 %s119, 1
        %s1084 = scalar_lea.sflag [#allocation4], %s1083
        %s1085 = sand.u32 %s119, 1
        %s1086 = smul.addr %s1085, 8
        %s1087 = scalar_lea.vmem [#allocation8], %s1086
        // Predicated region
        $region49: #{tpu_custom_call.1} parent=35 // pred_check
          %p1088 = pneg %p129
        $region50: #{tpu_custom_call.1} parent=35 // pred_check_branch
          %1090 = sbr.rel (%p1088) target = $region52
        $region51: #{tpu_custom_call.1} parent=35 // pred_region
          %s1092 = ssub.s32 128, 128
          %1093 = vsyncadd %s1084, %s1092
          %s1094 = smul.addr %s22, 128
          %s1095 = scalar_lea.hbm %s4, %s1094
          %s1097 = sshll.u32 %s1087, 4
          %s1098 = int_to_ptr.vmem [resolvable:$true] %s1097
          %1100 = dma.vmem_to_hbm [thread:$0]  %s1098, 128, %s1095, %s1084
        $region52: #{tpu_custom_call.1} parent=35 // pred_fallthru
          _
      $region36: #{tpu_custom_call.1} parent=5 // pred_fallthru
        _
      %p1101 = scmp.le.s32.totalorder 2, %s17
      // Predicated region
      $region53: #{tpu_custom_call.1} parent=5 // pred_check
        %p1102 = pneg %p1101
      $region54: #{tpu_custom_call.1} parent=5 // pred_check_branch
        %1104 = sbr.rel (%p1102) target = $region56
      $region55: #{tpu_custom_call.1} parent=5 // pred_region
        %s1105 = ssub.s32 %s17, 2
        // Predicated region
        $region57: #{tpu_custom_call.1} parent=55 // pred_check
          %p1106 = pneg %p135
        $region58: #{tpu_custom_call.1} parent=55 // pred_check_branch
          %1108 = sbr.rel (%p1106) target = $region60
        $region59: #{tpu_custom_call.1} parent=55 // pred_region
          %s1109 = sand.u32 %s120, 1
          %s1110 = scalar_lea.sflag [#allocation4], %s1109
          %s1111 = sand.u32 %s120, 1
          %s1112 = smul.addr %s1111, 8
          %s1113 = scalar_lea.vmem [#allocation8], %s1112
          %1114 = dma.done %s1110, 128
        $region60: #{tpu_custom_call.1} parent=55 // pred_fallthru
          _
      $region56: #{tpu_custom_call.1} parent=5 // pred_fallthru
        _
    $region6: #{tpu_custom_call.1} parent=1 // loop_footer
      %s21 = sadd.s32 1, %s17
    $region7: #{tpu_custom_call.1} parent=1 // loop_footer_branch
      %16 = sbr.rel target = $region3
    $region8: #{tpu_custom_call.1} parent=1 // loop_exit
      _
    %1115 = vsyncpa [#allocation3], 1
    %s1116 = scalar_lea.sflag [#allocation3], 1
    %1117 = vsyncpa %s1116, 1
    %1118 = vsyncpa [#allocation6], 1
    %1119 = vsyncpa [#allocation4], 1
    %s1120 = scalar_lea.sflag [#allocation4], 1
    %1121 = vsyncpa %s1120, 1

</llo_original>
